<compile_context>
chip_gen: v5e
topology: v5e:2x2
jax: 0.10.0
libtpu: 0.0.40
codegen_flags: <defaults>
</compile_context>

<pallas_src>
import functools
import math

import jax
import jax.numpy as jnp
from jax import lax
from jax.experimental import pallas as pl
from jax.experimental.pallas import tpu as pltpu

EPS = 1e-5


def _shift_flat(x, d):
    """out[:, p] = x[:, p + d] for 0 <= p + d < P, else 0.  `d` is a static int."""
    c, p = x.shape
    if d == 0:
        return x
    z = jnp.zeros((c, abs(d)), x.dtype)
    if d > 0:
        return jnp.concatenate([x[:, d:], z], axis=1)
    return jnp.concatenate([z, x[:, : p + d]], axis=1)


def _unify_kernel(x_ref, w9_ref, g_ref, b_ref, out_ref, *, H, W):
    # x_ref  : (nb, Cin, H*W)   channels on sublanes, flattened spatial on lanes
    # w9_ref : (9, Cout, Cin)   depthwise-folded pointwise weights, one per 3x3 tap
    # g_ref  : (Cout, 1)        LayerNorm gain
    # b_ref  : (Cout, 1)        LayerNorm bias
    # out_ref: (nb, Cout, H*W)  lane-dense output (effectively NCHW)
    nb = x_ref.shape[0]
    HW = H * W
    Cout = out_ref.shape[1]

    # Column index of every flattened spatial position (hoisted, computed once per step).
    col = lax.broadcasted_iota(jnp.int32, (1, HW), 1) % W
    keep_m1 = col <= (W - 2)   # kx = -1 taps never legally read source column W-1
    keep_p1 = col >= 1         # kx = +1 taps never legally read source column 0

    # Hoist weight / affine loads out of the batch loop.
    w9 = [w9_ref[k] for k in range(9)]        # 9 x (Cout, Cin)
    g = g_ref[...]                            # (Cout, 1), broadcasts across lanes
    b = b_ref[...]
    inv_sqrt2 = 1.0 / math.sqrt(2.0)

    for bi in range(nb):
        x = x_ref[bi]          # (Cin, HW)
        # Pre-mask the source columns that must come from the zero halo.
        x_by_kx = {
            -1: jnp.where(keep_m1, x, 0.0),
            0: x,
            1: jnp.where(keep_p1, x, 0.0),
        }

        # ---- separable conv, all FLOPs on the MXU: 9 accumulated (Cout,Cin)x(Cin,HW) ----
        acc = jnp.zeros((Cout, HW), jnp.float32)
        k = 0
        for ky in (-1, 0, 1):
            for kx in (-1, 0, 1):
                tap = _shift_flat(x_by_kx[kx], ky * W + kx)           # (Cin, HW)
                acc = acc + jnp.dot(w9[k], tap,
                                    preferred_element_type=jnp.float32)
                k += 1

        # ---- WithBias LayerNorm over the channel (sublane) axis, per pixel ----
        mean = jnp.mean(acc, axis=0, keepdims=True)                   # (1, HW)
        var = jnp.mean((acc - mean) ** 2, axis=0, keepdims=True)      # unbiased=False
        zn = (acc - mean) * lax.rsqrt(var + EPS) * g + b              # (Cout, HW)

        # ---- exact GELU (matches torch.nn.GELU default, approximate='none') ----
        out = 0.5 * zn * (1.0 + lax.erf(zn * inv_sqrt2))
        out_ref[bi] = out.astype(out_ref.dtype)


def _pick_batch_block(N, bytes_per_batch, vmem_budget=4 << 20):
    # Prefer >= 2 grid steps (keeps both v7x TensorCores busy, lets the DMA
    # pipeline overlap); within that, pack as many batch elements per step as a
    # conservative VMEM budget allows to amortize the ~0.35us per-step overhead.
    best = 1
    for nb in range(1, N + 1):
        if N % nb:
            continue
        if nb * bytes_per_batch > vmem_budget:
            break
        if N // nb >= 2 or N == 1:
            best = nb
    return best


def unify_layer_pallas(x_nchw, dw_weight, pw_weight, g, b, *,
                       compute_dtype=jnp.float32, batch_block=None):
    """x_nchw: (N, 3*seg_dim, H, W); dw_weight: (Cin,1,3,3); pw_weight: (Cout,Cin,1,1).

    compute_dtype: dtype of the input / folded weights feeding the MXU
    (jnp.bfloat16 recommended on v6e/v7x if the looser tolerance is acceptable).
    LayerNorm / GELU always run in float32.  Both convs are bias-free (bias=False).
    """
    N, Cin, H, W = x_nchw.shape
    Cout = pw_weight.shape[0]
    HW = H * W

    # Fold depthwise 3x3 into pointwise 1x1:  w9[k, o, c] = pw[o, c] * dw[c, ky, kx]
    dw = dw_weight[:, 0, :, :].reshape(Cin, 9)            # (Cin, 9), k = (ky+1)*3 + (kx+1)
    pw = pw_weight[:, :, 0, 0]                            # (Cout, Cin)
    w9 = (dw.T[:, None, :] * pw[None, :, :]).astype(compute_dtype)   # (9, Cout, Cin)

    # Free reshapes only — NCHW consumed directly; no transpose / pad HBM passes.
    x2 = x_nchw.reshape(N, Cin, HW).astype(compute_dtype)
    g2 = g.reshape(Cout, 1).astype(jnp.float32)
    b2 = b.reshape(Cout, 1).astype(jnp.float32)

    if batch_block is None:
        bytes_per_batch = HW * (Cin * x2.dtype.itemsize + Cout * 4) * 2   # dbl-buffered in+out
        batch_block = _pick_batch_block(N, bytes_per_batch)
    assert N % batch_block == 0, "batch_block must divide N"
    grid = (N // batch_block,)

    kernel = functools.partial(_unify_kernel, H=H, W=W)

    out = pl.pallas_call(
        kernel,
        out_shape=jax.ShapeDtypeStruct((N, Cout, HW), jnp.float32),
        grid_spec=pltpu.PrefetchScalarGridSpec(
            num_scalar_prefetch=0,
            grid=grid,
            in_specs=[
                pl.BlockSpec((batch_block, Cin, HW), lambda n: (n, 0, 0)),
                pl.BlockSpec((9, Cout, Cin), lambda n: (0, 0, 0)),
                pl.BlockSpec((Cout, 1), lambda n: (0, 0)),
                pl.BlockSpec((Cout, 1), lambda n: (0, 0)),
            ],
            out_specs=pl.BlockSpec((batch_block, Cout, HW), lambda n: (n, 0, 0)),
        ),
        compiler_params=pltpu.CompilerParams(
            dimension_semantics=("parallel",),
            vmem_limit_bytes=32 * 1024 * 1024,
        ),
    )(x2, w9, g2, b2)

    return out.reshape(N, Cout, H, W)     # free reshape; already NCHW


def unify_layer_ref(x_nchw, dw_weight, pw_weight, g, b):
    """Pure-JAX reference for correctness check (matches the PyTorch module)."""
    N, Cin, H, W = x_nchw.shape
    Cout = pw_weight.shape[0]
    x = jnp.transpose(x_nchw, (0, 2, 3, 1)).astype(jnp.float32)
    # depthwise conv: HWIO weights with I=1, O=Cin, feature_group_count=Cin
    w_dw = jnp.transpose(dw_weight, (2, 3, 1, 0)).astype(jnp.float32)   # (3,3,1,Cin)
    y = lax.conv_general_dilated(
        x, w_dw, window_strides=(1, 1), padding=((1, 1), (1, 1)),
        dimension_numbers=("NHWC", "HWIO", "NHWC"), feature_group_count=Cin)
    z = jnp.einsum("nhwc,co->nhwo", y, jnp.transpose(pw_weight[:, :, 0, 0], (1, 0)))
    mean = jnp.mean(z, axis=-1, keepdims=True)
    var = jnp.mean((z - mean) ** 2, axis=-1, keepdims=True)
    zn = (z - mean) / jnp.sqrt(var + EPS) * g.reshape(1, 1, 1, Cout) + b.reshape(1, 1, 1, Cout)
    out = 0.5 * zn * (1.0 + lax.erf(zn / math.sqrt(2.0)))
    return jnp.transpose(out, (0, 3, 1, 2))


if __name__ == "__main__":
    seg_dim = 4
    N, H, W = 2, 16, 16
    Cin, Cout = seg_dim * 3, seg_dim

    key = jax.random.PRNGKey(0)
    k_x, k_dw, k_pw, k_g, k_b = jax.random.split(key, 5)

    x = jax.random.normal(k_x, (N, Cin, H, W), dtype=jnp.float32)
    # deterministic synthetic parameters (bias=False for both convs, as in the module)
    dw_weight = 0.1 * jax.random.normal(k_dw, (Cin, 1, 3, 3), dtype=jnp.float32)
    pw_weight = 0.1 * jax.random.normal(k_pw, (Cout, Cin, 1, 1), dtype=jnp.float32)
    g = 1.0 + 0.1 * jax.random.normal(k_g, (Cout,), dtype=jnp.float32)
    b = 0.1 * jax.random.normal(k_b, (Cout,), dtype=jnp.float32)

    out = jax.block_until_ready(unify_layer_pallas(x, dw_weight, pw_weight, g, b))
    ref = jax.block_until_ready(unify_layer_ref(x, dw_weight, pw_weight, g, b))

    assert out.shape == (N, Cout, H, W)
    assert jnp.allclose(out, ref, atol=1e-4, rtol=1e-4), "mismatch vs reference"
    print("KERNEL_OK")
</pallas_src>

<mosaic_0001>
module attributes {stable_mosaic.version = 11 : i64} {
  func.func @_unify_kernel(%arg0: i32, %arg1: memref<1x12x256xf32, #tpu.memory_space<vmem>>, %arg2: memref<9x4x12xf32, #tpu.memory_space<vmem>>, %arg3: memref<4x1xf32, #tpu.memory_space<vmem>>, %arg4: memref<4x1xf32, #tpu.memory_space<vmem>>, %arg5: memref<1x4x256xf32, #tpu.memory_space<vmem>>) attributes {dimension_semantics = [#tpu.dimension_semantics<parallel>], iteration_bounds = array<i64: 2>, scalar_prefetch = 0 : i64, scratch_operands = 0 : i64, tpu.core_type = #tpu.core_type<tc>, window_params = [{transform_indices = @transform_0, window_bounds = array<i64: 1, 12, 256>}, {pipeline_mode = #tpu.pipeline_mode<synchronous>, transform_indices = @transform_1, window_bounds = array<i64: 9, 4, 12>}, {pipeline_mode = #tpu.pipeline_mode<synchronous>, transform_indices = @transform_2, window_bounds = array<i64: 4, 1>}, {pipeline_mode = #tpu.pipeline_mode<synchronous>, transform_indices = @transform_3, window_bounds = array<i64: 4, 1>}, {transform_indices = @transform_4, window_bounds = array<i64: 1, 4, 256>}]} {
    %0 = tpu.iota {dimensions = array<i32: 1>} : vector<1x256xi32>
    %c16_i32 = arith.constant 16 : i32
    %c0_i32 = arith.constant 0 : i32
    %1 = arith.cmpi eq, %c16_i32, %c0_i32 : i32
    %c1_i32 = arith.constant 1 : i32
    %2 = arith.select %1, %c1_i32, %c16_i32 : i32
    %3 = vector.broadcast %2 : i32 to vector<1x256xi32>
    %4 = arith.remsi %0, %3 : vector<1x256xi32>
    %c0_i32_0 = arith.constant 0 : i32
    %5 = vector.broadcast %c0_i32_0 : i32 to vector<1x256xi32>
    %6 = arith.cmpi ne, %4, %5 : vector<1x256xi32>
    %c0_i32_1 = arith.constant 0 : i32
    %7 = vector.broadcast %c0_i32_1 : i32 to vector<1x256xi32>
    %8 = arith.cmpi slt, %4, %7 : vector<1x256xi32>
    %c0_i32_2 = arith.constant 0 : i32
    %9 = arith.cmpi slt, %2, %c0_i32_2 : i32
    %10 = vector.broadcast %9 : i1 to vector<1x256xi1>
    %11 = vector.broadcast %10 : vector<1x256xi1> to vector<1x256xi1>
    %12 = arith.xori %8, %11 : vector<1x256xi1>
    %13 = arith.andi %12, %6 : vector<1x256xi1>
    %14 = vector.broadcast %2 : i32 to vector<1x256xi32>
    %15 = arith.addi %4, %14 : vector<1x256xi32>
    %16 = arith.select %13, %15, %4 : vector<1x256xi1>, vector<1x256xi32>
    %c14_i32 = arith.constant 14 : i32
    %17 = vector.broadcast %c14_i32 : i32 to vector<1x256xi32>
    %18 = arith.cmpi sle, %16, %17 : vector<1x256xi32>
    %c1_i32_3 = arith.constant 1 : i32
    %19 = vector.broadcast %c1_i32_3 : i32 to vector<1x256xi32>
    %20 = arith.cmpi sge, %16, %19 : vector<1x256xi32>
    %c0 = arith.constant 0 : index
    %c0_4 = arith.constant 0 : index
    %c0_5 = arith.constant 0 : index
    %21 = vector.load %arg2[%c0, %c0_4, %c0_5] : memref<9x4x12xf32, #tpu.memory_space<vmem>>, vector<1x4x12xf32>
    %22 = vector.shape_cast %21 : vector<1x4x12xf32> to vector<4x12xf32>
    %c1 = arith.constant 1 : index
    %c0_6 = arith.constant 0 : index
    %c0_7 = arith.constant 0 : index
    %23 = vector.load %arg2[%c1, %c0_6, %c0_7] : memref<9x4x12xf32, #tpu.memory_space<vmem>>, vector<1x4x12xf32>
    %24 = vector.shape_cast %23 : vector<1x4x12xf32> to vector<4x12xf32>
    %c2 = arith.constant 2 : index
    %c0_8 = arith.constant 0 : index
    %c0_9 = arith.constant 0 : index
    %25 = vector.load %arg2[%c2, %c0_8, %c0_9] : memref<9x4x12xf32, #tpu.memory_space<vmem>>, vector<1x4x12xf32>
    %26 = vector.shape_cast %25 : vector<1x4x12xf32> to vector<4x12xf32>
    %c3 = arith.constant 3 : index
    %c0_10 = arith.constant 0 : index
    %c0_11 = arith.constant 0 : index
    %27 = vector.load %arg2[%c3, %c0_10, %c0_11] : memref<9x4x12xf32, #tpu.memory_space<vmem>>, vector<1x4x12xf32>
    %28 = vector.shape_cast %27 : vector<1x4x12xf32> to vector<4x12xf32>
    %c4 = arith.constant 4 : index
    %c0_12 = arith.constant 0 : index
    %c0_13 = arith.constant 0 : index
    %29 = vector.load %arg2[%c4, %c0_12, %c0_13] : memref<9x4x12xf32, #tpu.memory_space<vmem>>, vector<1x4x12xf32>
    %30 = vector.shape_cast %29 : vector<1x4x12xf32> to vector<4x12xf32>
    %c5 = arith.constant 5 : index
    %c0_14 = arith.constant 0 : index
    %c0_15 = arith.constant 0 : index
    %31 = vector.load %arg2[%c5, %c0_14, %c0_15] : memref<9x4x12xf32, #tpu.memory_space<vmem>>, vector<1x4x12xf32>
    %32 = vector.shape_cast %31 : vector<1x4x12xf32> to vector<4x12xf32>
    %c6 = arith.constant 6 : index
    %c0_16 = arith.constant 0 : index
    %c0_17 = arith.constant 0 : index
    %33 = vector.load %arg2[%c6, %c0_16, %c0_17] : memref<9x4x12xf32, #tpu.memory_space<vmem>>, vector<1x4x12xf32>
    %34 = vector.shape_cast %33 : vector<1x4x12xf32> to vector<4x12xf32>
    %c7 = arith.constant 7 : index
    %c0_18 = arith.constant 0 : index
    %c0_19 = arith.constant 0 : index
    %35 = vector.load %arg2[%c7, %c0_18, %c0_19] : memref<9x4x12xf32, #tpu.memory_space<vmem>>, vector<1x4x12xf32>
    %36 = vector.shape_cast %35 : vector<1x4x12xf32> to vector<4x12xf32>
    %c8 = arith.constant 8 : index
    %c0_20 = arith.constant 0 : index
    %c0_21 = arith.constant 0 : index
    %37 = vector.load %arg2[%c8, %c0_20, %c0_21] : memref<9x4x12xf32, #tpu.memory_space<vmem>>, vector<1x4x12xf32>
    %38 = vector.shape_cast %37 : vector<1x4x12xf32> to vector<4x12xf32>
    %c0_22 = arith.constant 0 : index
    %c0_23 = arith.constant 0 : index
    %39 = vector.load %arg3[%c0_22, %c0_23] : memref<4x1xf32, #tpu.memory_space<vmem>>, vector<4x1xf32>
    %c0_24 = arith.constant 0 : index
    %c0_25 = arith.constant 0 : index
    %40 = vector.load %arg4[%c0_24, %c0_25] : memref<4x1xf32, #tpu.memory_space<vmem>>, vector<4x1xf32>
    %c0_26 = arith.constant 0 : index
    %c0_27 = arith.constant 0 : index
    %c0_28 = arith.constant 0 : index
    %41 = vector.load %arg1[%c0_26, %c0_27, %c0_28] : memref<1x12x256xf32, #tpu.memory_space<vmem>>, vector<1x12x256xf32>
    %42 = vector.shape_cast %41 : vector<1x12x256xf32> to vector<12x256xf32>
    %cst = arith.constant 0.000000e+00 : f32
    %43 = vector.shape_cast %18 : vector<1x256xi1> to vector<1x256xi1>
    %44 = vector.broadcast %43 : vector<1x256xi1> to vector<12x256xi1>
    %45 = vector.broadcast %cst : f32 to vector<12x256xf32>
    %46 = arith.select %44, %42, %45 : vector<12x256xi1>, vector<12x256xf32>
    %cst_29 = arith.constant 0.000000e+00 : f32
    %47 = vector.shape_cast %20 : vector<1x256xi1> to vector<1x256xi1>
    %48 = vector.broadcast %47 : vector<1x256xi1> to vector<12x256xi1>
    %49 = vector.broadcast %cst_29 : f32 to vector<12x256xf32>
    %50 = arith.select %48, %42, %49 : vector<12x256xi1>, vector<12x256xf32>
    %cst_30 = arith.constant 0.000000e+00 : f32
    %51 = vector.broadcast %cst_30 : f32 to vector<4x256xf32>
    %cst_31 = arith.constant 0.000000e+00 : f32
    %52 = vector.broadcast %cst_31 : f32 to vector<12x17xf32>
    %53 = vector.extract_strided_slice %46 {offsets = [0, 0], sizes = [12, 239], strides = [1, 1]} : vector<12x256xf32> to vector<12x239xf32>
    %54 = tpu.concatenate %52, %53 in 1 : vector<12x17xf32>, vector<12x239xf32> -> vector<12x256xf32>
    %cst_32 = arith.constant dense<0.000000e+00> : vector<4x256xf32>
    %55 = tpu.matmul %22, %54, %cst_32 {dimension_numbers = #tpu.dot_dimension_numbers<[1], [0], [0], [1], [0, 0, 1, 1], [], []>} : vector<4x12xf32>, vector<12x256xf32>, vector<4x256xf32> -> vector<4x256xf32>
    %56 = arith.addf %51, %55 : vector<4x256xf32>
    %cst_33 = arith.constant 0.000000e+00 : f32
    %57 = vector.broadcast %cst_33 : f32 to vector<12x16xf32>
    %58 = vector.extract_strided_slice %42 {offsets = [0, 0], sizes = [12, 240], strides = [1, 1]} : vector<12x256xf32> to vector<12x240xf32>
    %59 = tpu.concatenate %57, %58 in 1 : vector<12x16xf32>, vector<12x240xf32> -> vector<12x256xf32>
    %cst_34 = arith.constant dense<0.000000e+00> : vector<4x256xf32>
    %60 = tpu.matmul %24, %59, %cst_34 {dimension_numbers = #tpu.dot_dimension_numbers<[1], [0], [0], [1], [0, 0, 1, 1], [], []>} : vector<4x12xf32>, vector<12x256xf32>, vector<4x256xf32> -> vector<4x256xf32>
    %61 = arith.addf %56, %60 : vector<4x256xf32>
    %cst_35 = arith.constant 0.000000e+00 : f32
    %62 = vector.broadcast %cst_35 : f32 to vector<12x15xf32>
    %63 = vector.extract_strided_slice %50 {offsets = [0, 0], sizes = [12, 241], strides = [1, 1]} : vector<12x256xf32> to vector<12x241xf32>
    %64 = tpu.concatenate %62, %63 in 1 : vector<12x15xf32>, vector<12x241xf32> -> vector<12x256xf32>
    %cst_36 = arith.constant dense<0.000000e+00> : vector<4x256xf32>
    %65 = tpu.matmul %26, %64, %cst_36 {dimension_numbers = #tpu.dot_dimension_numbers<[1], [0], [0], [1], [0, 0, 1, 1], [], []>} : vector<4x12xf32>, vector<12x256xf32>, vector<4x256xf32> -> vector<4x256xf32>
    %66 = arith.addf %61, %65 : vector<4x256xf32>
    %cst_37 = arith.constant 0.000000e+00 : f32
    %67 = vector.broadcast %cst_37 : f32 to vector<12x1xf32>
    %68 = vector.extract_strided_slice %46 {offsets = [0, 0], sizes = [12, 255], strides = [1, 1]} : vector<12x256xf32> to vector<12x255xf32>
    %69 = tpu.concatenate %67, %68 in 1 : vector<12x1xf32>, vector<12x255xf32> -> vector<12x256xf32>
    %cst_38 = arith.constant dense<0.000000e+00> : vector<4x256xf32>
    %70 = tpu.matmul %28, %69, %cst_38 {dimension_numbers = #tpu.dot_dimension_numbers<[1], [0], [0], [1], [0, 0, 1, 1], [], []>} : vector<4x12xf32>, vector<12x256xf32>, vector<4x256xf32> -> vector<4x256xf32>
    %71 = arith.addf %66, %70 : vector<4x256xf32>
    %cst_39 = arith.constant dense<0.000000e+00> : vector<4x256xf32>
    %72 = tpu.matmul %30, %42, %cst_39 {dimension_numbers = #tpu.dot_dimension_numbers<[1], [0], [0], [1], [0, 0, 1, 1], [], []>} : vector<4x12xf32>, vector<12x256xf32>, vector<4x256xf32> -> vector<4x256xf32>
    %73 = arith.addf %71, %72 : vector<4x256xf32>
    %cst_40 = arith.constant 0.000000e+00 : f32
    %74 = vector.broadcast %cst_40 : f32 to vector<12x1xf32>
    %75 = vector.extract_strided_slice %50 {offsets = [0, 1], sizes = [12, 255], strides = [1, 1]} : vector<12x256xf32> to vector<12x255xf32>
    %76 = tpu.concatenate %75, %74 in 1 : vector<12x255xf32>, vector<12x1xf32> -> vector<12x256xf32>
    %cst_41 = arith.constant dense<0.000000e+00> : vector<4x256xf32>
    %77 = tpu.matmul %32, %76, %cst_41 {dimension_numbers = #tpu.dot_dimension_numbers<[1], [0], [0], [1], [0, 0, 1, 1], [], []>} : vector<4x12xf32>, vector<12x256xf32>, vector<4x256xf32> -> vector<4x256xf32>
    %78 = arith.addf %73, %77 : vector<4x256xf32>
    %cst_42 = arith.constant 0.000000e+00 : f32
    %79 = vector.broadcast %cst_42 : f32 to vector<12x15xf32>
    %80 = vector.extract_strided_slice %46 {offsets = [0, 15], sizes = [12, 241], strides = [1, 1]} : vector<12x256xf32> to vector<12x241xf32>
    %81 = tpu.concatenate %80, %79 in 1 : vector<12x241xf32>, vector<12x15xf32> -> vector<12x256xf32>
    %cst_43 = arith.constant dense<0.000000e+00> : vector<4x256xf32>
    %82 = tpu.matmul %34, %81, %cst_43 {dimension_numbers = #tpu.dot_dimension_numbers<[1], [0], [0], [1], [0, 0, 1, 1], [], []>} : vector<4x12xf32>, vector<12x256xf32>, vector<4x256xf32> -> vector<4x256xf32>
    %83 = arith.addf %78, %82 : vector<4x256xf32>
    %cst_44 = arith.constant 0.000000e+00 : f32
    %84 = vector.broadcast %cst_44 : f32 to vector<12x16xf32>
    %85 = vector.extract_strided_slice %42 {offsets = [0, 16], sizes = [12, 240], strides = [1, 1]} : vector<12x256xf32> to vector<12x240xf32>
    %86 = tpu.concatenate %85, %84 in 1 : vector<12x240xf32>, vector<12x16xf32> -> vector<12x256xf32>
    %cst_45 = arith.constant dense<0.000000e+00> : vector<4x256xf32>
    %87 = tpu.matmul %36, %86, %cst_45 {dimension_numbers = #tpu.dot_dimension_numbers<[1], [0], [0], [1], [0, 0, 1, 1], [], []>} : vector<4x12xf32>, vector<12x256xf32>, vector<4x256xf32> -> vector<4x256xf32>
    %88 = arith.addf %83, %87 : vector<4x256xf32>
    %cst_46 = arith.constant 0.000000e+00 : f32
    %89 = vector.broadcast %cst_46 : f32 to vector<12x17xf32>
    %90 = vector.extract_strided_slice %50 {offsets = [0, 17], sizes = [12, 239], strides = [1, 1]} : vector<12x256xf32> to vector<12x239xf32>
    %91 = tpu.concatenate %90, %89 in 1 : vector<12x239xf32>, vector<12x17xf32> -> vector<12x256xf32>
    %cst_47 = arith.constant dense<0.000000e+00> : vector<4x256xf32>
    %92 = tpu.matmul %38, %91, %cst_47 {dimension_numbers = #tpu.dot_dimension_numbers<[1], [0], [0], [1], [0, 0, 1, 1], [], []>} : vector<4x12xf32>, vector<12x256xf32>, vector<4x256xf32> -> vector<4x256xf32>
    %93 = arith.addf %88, %92 : vector<4x256xf32>
    %cst_48 = arith.constant dense<0.000000e+00> : vector<256xf32>
    %94 = vector.multi_reduction <add>, %93, %cst_48 [0] : vector<4x256xf32> to vector<256xf32>
    %95 = vector.shape_cast %94 : vector<256xf32> to vector<1x256xf32>
    %cst_49 = arith.constant 4.000000e+00 : f32
    %96 = vector.broadcast %cst_49 : f32 to vector<1x256xf32>
    %97 = arith.divf %95, %96 : vector<1x256xf32>
    %98 = vector.broadcast %97 : vector<1x256xf32> to vector<4x256xf32>
    %99 = arith.subf %93, %98 : vector<4x256xf32>
    %100 = arith.mulf %99, %99 : vector<4x256xf32>
    %cst_50 = arith.constant dense<0.000000e+00> : vector<256xf32>
    %101 = vector.multi_reduction <add>, %100, %cst_50 [0] : vector<4x256xf32> to vector<256xf32>
    %102 = vector.shape_cast %101 : vector<256xf32> to vector<1x256xf32>
    %cst_51 = arith.constant 4.000000e+00 : f32
    %103 = vector.broadcast %cst_51 : f32 to vector<1x256xf32>
    %104 = arith.divf %102, %103 : vector<1x256xf32>
    %105 = vector.broadcast %97 : vector<1x256xf32> to vector<4x256xf32>
    %106 = arith.subf %93, %105 : vector<4x256xf32>
    %cst_52 = arith.constant 9.99999974E-6 : f32
    %107 = vector.broadcast %cst_52 : f32 to vector<1x256xf32>
    %108 = arith.addf %104, %107 : vector<1x256xf32>
    %109 = math.rsqrt %108 : vector<1x256xf32>
    %110 = vector.broadcast %109 : vector<1x256xf32> to vector<4x256xf32>
    %111 = arith.mulf %106, %110 : vector<4x256xf32>
    %112 = vector.broadcast %39 : vector<4x1xf32> to vector<4x256xf32>
    %113 = arith.mulf %111, %112 : vector<4x256xf32>
    %114 = vector.broadcast %40 : vector<4x1xf32> to vector<4x256xf32>
    %115 = arith.addf %113, %114 : vector<4x256xf32>
    %cst_53 = arith.constant 5.000000e-01 : f32
    %116 = vector.broadcast %cst_53 : f32 to vector<4x256xf32>
    %117 = arith.mulf %116, %115 : vector<4x256xf32>
    %cst_54 = arith.constant 0.707106769 : f32
    %118 = vector.broadcast %cst_54 : f32 to vector<4x256xf32>
    %119 = arith.mulf %115, %118 : vector<4x256xf32>
    %120 = math.erf %119 : vector<4x256xf32>
    %cst_55 = arith.constant 1.000000e+00 : f32
    %121 = vector.broadcast %cst_55 : f32 to vector<4x256xf32>
    %122 = arith.addf %121, %120 : vector<4x256xf32>
    %123 = arith.mulf %117, %122 : vector<4x256xf32>
    %c0_56 = arith.constant 0 : index
    %c0_57 = arith.constant 0 : index
    %c0_58 = arith.constant 0 : index
    %124 = vector.load %arg5[%c0_56, %c0_57, %c0_58] : memref<1x4x256xf32, #tpu.memory_space<vmem>>, vector<1x4x256xf32>
    %125 = vector.shape_cast %124 : vector<1x4x256xf32> to vector<4x256xf32>
    %126 = vector.shape_cast %123 : vector<4x256xf32> to vector<1x4x256xf32>
    tpu.vector_store %arg5[%c0_56, %c0_57, %c0_58], %126 {strides = array<i32>} : memref<1x4x256xf32, #tpu.memory_space<vmem>>, vector<1x4x256xf32>,
    return
  }
  func.func @transform_0(%arg0: i32) -> (i32, i32, i32) {
    %c0_i32 = arith.constant 0 : i32
    %c0_i32_0 = arith.constant 0 : i32
    %c0_i32_1 = arith.constant 0 : i32
    return %arg0, %c0_i32, %c0_i32_0 : i32, i32, i32
  }
  func.func @transform_1(%arg0: i32) -> (i32, i32, i32) {
    %c0_i32 = arith.constant 0 : i32
    %c0_i32_0 = arith.constant 0 : i32
    %c0_i32_1 = arith.constant 0 : i32
    %c0_i32_2 = arith.constant 0 : i32
    return %c0_i32, %c0_i32_0, %c0_i32_1 : i32, i32, i32
  }
  func.func @transform_2(%arg0: i32) -> (i32, i32) {
    %c0_i32 = arith.constant 0 : i32
    %c0_i32_0 = arith.constant 0 : i32
    %c0_i32_1 = arith.constant 0 : i32
    return %c0_i32, %c0_i32_0 : i32, i32
  }
  func.func @transform_3(%arg0: i32) -> (i32, i32) {
    %c0_i32 = arith.constant 0 : i32
    %c0_i32_0 = arith.constant 0 : i32
    %c0_i32_1 = arith.constant 0 : i32
    return %c0_i32, %c0_i32_0 : i32, i32
  }
  func.func @transform_4(%arg0: i32) -> (i32, i32, i32) {
    %c0_i32 = arith.constant 0 : i32
    %c0_i32_0 = arith.constant 0 : i32
    %c0_i32_1 = arith.constant 0 : i32
    return %arg0, %c0_i32, %c0_i32_0 : i32, i32, i32
  }
}

</mosaic_0001>

<llo_original>
// kernel: tpu_custom_call.1
$region0: #{tpu_custom_call.1}
  #allocation0 [shape = 'u32[]', space=smem, size = 0x4, offset = 0x4, fixed_abs, tag = 'smem constant byte address 0x4 - core index']
  #allocation1 [shape = 'u32[72,128]{1,0:T(1,128)}', space=vmem, size = 0x9000, scoped, tag = 'internal scratch']
  %s0 = inlined_call_operand.vmem [shape: f32[2,12,256], index: 0, kind: input, shape index: {}]
  %s1 = inlined_call_operand.vmem [shape: f32[9,4,12], index: 1, kind: input, shape index: {}]
  %s2 = inlined_call_operand.vmem [shape: f32[4,1], index: 2, kind: input, shape index: {}]
  %s3 = inlined_call_operand.vmem [shape: f32[4,1], index: 3, kind: input, shape index: {}]
  %s4 = inlined_call_operand.hbm [shape: f32[2,4,256], index: 4, kind: output, shape index: {}]
  %s5 = sld [smem:[#allocation0]]
  $region49: #{tpu_custom_call.1} parent=0
    _
  %s7 = ssub.s32 1, %s5
  %s8 = scalar_select 0, %s7, %s5
  $region1: #{tpu_custom_call.1} parent=0
    #allocation2 [shape = 'u8[8192]{0}', space=vmem, size = 0x2000, scoped, tag = 'output window, operand 0']
    #allocation3 [shape = 's32[2]{0}', space=sflag, size = 0x8, scoped, tag = 'scoped memory for tpu_custom_call.1']
    %9 = vsyncpa [#allocation3], 0
    %s10 = scalar_lea.sflag [#allocation3], 1
    %11 = vsyncpa %s10, 0
    loop: start=0, step=1, limit=4
    $region2: #{tpu_custom_call.1} parent=1 // loop_pre_header
      _
    $region3: #{tpu_custom_call.1} parent=1 // loop_header
      %s13 = sphi 0, %s17
      %p14 = scmp.ge.s32.totalorder %s13, 4
      %s23 = sphi 0, %s25
      %s26 = sphi 0, %s23
      %s27 = sphi 0, %s26
      %s43 = sphi 0, %s27
      %s47 = sphi 0, %s47
      %s49 = sphi 0, %s47
      %s50 = sphi 0, %s49
      %s64 = sphi 0, %s50
      %s68 = sphi 0, %s68
      %s70 = sphi 0, %s68
      %s71 = sphi 0, %s70
      %s85 = sphi 0, %s71
      %s89 = sphi 0, %s89
      %s91 = sphi 0, %s89
      %s92 = sphi 0, %s91
      %s106 = sphi 0, %s92
      %s112 = sphi 0, %s114
      %s115 = sphi 0, %s112
      %s116 = sphi 0, %s115
      %s132 = sphi 0, %s116
    $region4: #{tpu_custom_call.1} parent=1 // loop_header_branch
      %16 = sbr.rel (%p14) target = $region8
    $region5: #{tpu_custom_call.1} parent=1 // loop_body
      %s18 = ssub.s32 %s13, 1
      %s19 = ssub.s32 %s13, 2
      %s20 = sadd.s32 %s13, 1
      %s21 = ssub.s32 %s13, %s20
      %p22 = scmp.eq.s32.totalorder %s21, 0
      %s24 = sadd.s32 %s23, 1
      %s25 = scalar_select %p22, %s23, %s24
      %p28 = pneg %p22
      %p29 = scmp.eq.s32.totalorder %s13, 1
      %p30 = por %p28, %p29
      %p31 = scmp.ne.s32.totalorder %s23, %s26
      %p32 = scmp.eq.s32.totalorder %s13, 0
      %p33 = por %p31, %p32
      %p34 = scmp.ne.s32.totalorder %s23, %s26
      %p35 = scmp.eq.s32.totalorder %s18, 1
      %p36 = por %p34, %p35
      %p37 = scmp.ne.s32.totalorder %s26, %s27
      %p38 = scmp.eq.s32.totalorder %s18, 0
      %p39 = por %p37, %p38
      %p40 = scmp.ne.s32.totalorder %s26, %s27
      %p41 = scmp.eq.s32.totalorder %s19, 1
      %p42 = por %p40, %p41
      %p44 = scmp.ne.s32.totalorder %s27, %s43
      %p45 = scmp.eq.s32.totalorder %s19, 0
      %p46 = por %p44, %p45
      %s48 = sadd.s32 %s47, 1
      %p51 = scmp.eq.s32.totalorder %s13, 1
      %p52 = scmp.ne.s32.totalorder %s47, %s49
      %p53 = scmp.eq.s32.totalorder %s13, 0
      %p54 = por %p52, %p53
      %p55 = scmp.ne.s32.totalorder %s47, %s49
      %p56 = scmp.eq.s32.totalorder %s18, 1
      %p57 = por %p55, %p56
      %p58 = scmp.ne.s32.totalorder %s49, %s50
      %p59 = scmp.eq.s32.totalorder %s18, 0
      %p60 = por %p58, %p59
      %p61 = scmp.ne.s32.totalorder %s49, %s50
      %p62 = scmp.eq.s32.totalorder %s19, 1
      %p63 = por %p61, %p62
      %p65 = scmp.ne.s32.totalorder %s50, %s64
      %p66 = scmp.eq.s32.totalorder %s19, 0
      %p67 = por %p65, %p66
      %s69 = sadd.s32 %s68, 1
      %p72 = scmp.eq.s32.totalorder %s13, 1
      %p73 = scmp.ne.s32.totalorder %s68, %s70
      %p74 = scmp.eq.s32.totalorder %s13, 0
      %p75 = por %p73, %p74
      %p76 = scmp.ne.s32.totalorder %s68, %s70
      %p77 = scmp.eq.s32.totalorder %s18, 1
      %p78 = por %p76, %p77
      %p79 = scmp.ne.s32.totalorder %s70, %s71
      %p80 = scmp.eq.s32.totalorder %s18, 0
      %p81 = por %p79, %p80
      %p82 = scmp.ne.s32.totalorder %s70, %s71
      %p83 = scmp.eq.s32.totalorder %s19, 1
      %p84 = por %p82, %p83
      %p86 = scmp.ne.s32.totalorder %s71, %s85
      %p87 = scmp.eq.s32.totalorder %s19, 0
      %p88 = por %p86, %p87
      %s90 = sadd.s32 %s89, 1
      %p93 = scmp.eq.s32.totalorder %s13, 1
      %p94 = scmp.ne.s32.totalorder %s89, %s91
      %p95 = scmp.eq.s32.totalorder %s13, 0
      %p96 = por %p94, %p95
      %p97 = scmp.ne.s32.totalorder %s89, %s91
      %p98 = scmp.eq.s32.totalorder %s18, 1
      %p99 = por %p97, %p98
      %p100 = scmp.ne.s32.totalorder %s91, %s92
      %p101 = scmp.eq.s32.totalorder %s18, 0
      %p102 = por %p100, %p101
      %p103 = scmp.ne.s32.totalorder %s91, %s92
      %p104 = scmp.eq.s32.totalorder %s19, 1
      %p105 = por %p103, %p104
      %p107 = scmp.ne.s32.totalorder %s92, %s106
      %p108 = scmp.eq.s32.totalorder %s19, 0
      %p109 = por %p107, %p108
      %s110 = ssub.s32 %s13, %s20
      %p111 = scmp.eq.s32.totalorder %s110, 0
      %s113 = sadd.s32 %s112, 1
      %s114 = scalar_select %p111, %s112, %s113
      %p117 = pneg %p111
      %p118 = scmp.eq.s32.totalorder %s13, 1
      %p119 = por %p117, %p118
      %p120 = scmp.ne.s32.totalorder %s112, %s115
      %p121 = scmp.eq.s32.totalorder %s13, 0
      %p122 = por %p120, %p121
      %p123 = scmp.ne.s32.totalorder %s112, %s115
      %p124 = scmp.eq.s32.totalorder %s18, 1
      %p125 = por %p123, %p124
      %p126 = scmp.ne.s32.totalorder %s115, %s116
      %p127 = scmp.eq.s32.totalorder %s18, 0
      %p128 = por %p126, %p127
      %p129 = scmp.ne.s32.totalorder %s115, %s116
      %p130 = scmp.eq.s32.totalorder %s19, 1
      %p131 = por %p129, %p130
      %p133 = scmp.ne.s32.totalorder %s116, %s132
      %p134 = scmp.eq.s32.totalorder %s19, 0
      %p135 = por %p133, %p134
      %p136 = scmp.le.s32.totalorder 1, %s13
      %p137 = scmp.lt.s32.totalorder %s13, 3
      %p138 = pnand %p136, %p137
      %p139 = pneg %p138
      // Predicated region
      $region9: #{tpu_custom_call.1} parent=5 // pred_check
        _
      $region10: #{tpu_custom_call.1} parent=5 // pred_check_branch
        %141 = sbr.rel (%p138) target = $region12
      $region11: #{tpu_custom_call.1} parent=5 // pred_region
        %s142 = ssub.s32 %s13, 1
        // Predicated region
        $region13: #{tpu_custom_call.1} parent=11 // pred_check
          %p143 = pneg %p60
        $region14: #{tpu_custom_call.1} parent=11 // pred_check_branch
          %145 = sbr.rel (%p143) target = $region16
        $region15: #{tpu_custom_call.1} parent=11 // pred_region
          _
        $region16: #{tpu_custom_call.1} parent=11 // pred_fallthru
          _
        // Predicated region
        $region17: #{tpu_custom_call.1} parent=11 // pred_check
          %p146 = pneg %p81
        $region18: #{tpu_custom_call.1} parent=11 // pred_check_branch
          %148 = sbr.rel (%p146) target = $region20
        $region19: #{tpu_custom_call.1} parent=11 // pred_region
          _
        $region20: #{tpu_custom_call.1} parent=11 // pred_fallthru
          _
        // Predicated region
        $region21: #{tpu_custom_call.1} parent=11 // pred_check
          %p149 = pneg %p102
        $region22: #{tpu_custom_call.1} parent=11 // pred_check_branch
          %151 = sbr.rel (%p149) target = $region24
        $region23: #{tpu_custom_call.1} parent=11 // pred_region
          _
        $region24: #{tpu_custom_call.1} parent=11 // pred_fallthru
          _
      $region12: #{tpu_custom_call.1} parent=5 // pred_fallthru
        _
      %p152 = scmp.lt.s32.totalorder %s13, 2
      // Predicated region
      $region25: #{tpu_custom_call.1} parent=5 // pred_check
        %p153 = pneg %p152
      $region26: #{tpu_custom_call.1} parent=5 // pred_check_branch
        %155 = sbr.rel (%p153) target = $region28
      $region27: #{tpu_custom_call.1} parent=5 // pred_region
        // Predicated region
        $region29: #{tpu_custom_call.1} parent=27 // pred_check
          %p156 = pneg %p33
        $region30: #{tpu_custom_call.1} parent=27 // pred_check_branch
          %158 = sbr.rel (%p156) target = $region32
        $region31: #{tpu_custom_call.1} parent=27 // pred_region
          %p159 = scmp.lt.s32.totalorder %s13, 1
          %s160 = scalar_select %p159, %s13, 1
          %s161 = smul.addr %s160, 4
          %s162 = smul.addr %s161, 8
          %s163 = scalar_lea.vmem %s0, %s162
        $region32: #{tpu_custom_call.1} parent=27 // pred_fallthru
          _
      $region28: #{tpu_custom_call.1} parent=5 // pred_fallthru
        _
      %p164 = scmp.le.s32.totalorder 1, %s13
      %p165 = scmp.lt.s32.totalorder %s13, 3
      %p166 = pnand %p164, %p165
      %p167 = pneg %p166
      // Predicated region
      $region33: #{tpu_custom_call.1} parent=5 // pred_check
        _
      $region34: #{tpu_custom_call.1} parent=5 // pred_check_branch
        %169 = sbr.rel (%p166) target = $region36
      $region35: #{tpu_custom_call.1} parent=5 // pred_region
        %s170 = ssub.s32 %s13, 1
        %p171 = scmp.lt.s32.totalorder %s18, 1
        %s172 = scalar_select %p171, %s18, 1
        %s173 = smul.addr %s172, 4
        %s174 = smul.addr %s173, 8
        %s175 = scalar_lea.vmem %s0, %s174
        %p176 = pneg %p39
        %p177 = pneg %p36
        %p178 = pneg %p60
        %p179 = pneg %p57
        %p180 = pneg %p81
        %p181 = pneg %p78
        %p182 = pneg %p102
        %p183 = pneg %p99
        %p184 = pneg %p128
        %p185 = pneg %p125
        %s186 = sand.u32 %s115, 1
        %s187 = scalar_lea.sflag [#allocation3], %s186
        %s188 = sand.u32 %s115, 1
        %s189 = smul.addr %s188, 8
        %s190 = scalar_lea.vmem [#allocation2], %s189
        %p191 = scmp.lt.s32.totalorder %s18, 1
        %s192 = scalar_select %p191, %s18, 1
        %s193 = smul.addr %s192, 4
        %s194 = smul.addr %s193, 8
        %s195 = scalar_lea.vmem %s0, %s194
        %v196 = vlaneseq
        %v197 = vand.u32 %v196, 127
        %v198 = vadd.s32 %v197, 128
        %vm199 = vcmp.lt.s32.totalorder %v197, 0
        %v200 = vsub.s32 0, %v197
        %v201 = vsel %vm199, %v200, %v197
        %v202 = vshrl.u32 %v201, 4
        %v203 = vand.u32 %v201, 15
        %v204 = vsub.s32 0, %v203
        %v205 = vsel %vm199, %v204, %v203
        %vm206 = vcmp.lt.s32.totalorder %v198, 0
        %v207 = vsub.s32 0, %v198
        %v208 = vsel %vm206, %v207, %v198
        %v209 = vshrl.u32 %v208, 4
        %v210 = vand.u32 %v208, 15
        %v211 = vsub.s32 0, %v210
        %v212 = vsel %vm206, %v211, %v210
        %vm213 = vcmp.ne.s32.totalorder %v205, 0
        %vm214 = vcmp.ne.s32.totalorder %v212, 0
        %vm215 = vcmp.lt.s32.totalorder %v205, 0
        %vm216 = vcmp.lt.s32.totalorder %v212, 0
        %vm217 = vmand %vm215, %vm213
        %vm218 = vmand %vm216, %vm214
        %v219 = vadd.s32 %v205, 16
        %v220 = vadd.s32 %v212, 16
        %v221 = vsel %vm217, %v219, %v205
        %v222 = vsel %vm218, %v220, %v212
        %vm223 = vcmp.le.s32.totalorder %v221, 14
        %vm224 = vcmp.le.s32.totalorder %v222, 14
        %vm225 = vcmp.ge.s32.totalorder %v221, 1
        %vm226 = vcmp.ge.s32.totalorder %v222, 1
        %v227 = vld [vmem:[%s1] sm:$0xf]
        %s228 = scalar_lea.vmem %s1, 4
        %v229 = vld [vmem:[%s228] sm:$0xf]
        %s230 = scalar_lea.vmem %s1, 8
        %v231 = vld [vmem:[%s230] sm:$0xf]
        %s232 = scalar_lea.vmem %s1, 12
        %v233 = vld [vmem:[%s232] sm:$0xf]
        %s234 = scalar_lea.vmem %s1, 16
        %v235 = vld [vmem:[%s234] sm:$0xf]
        %s236 = scalar_lea.vmem %s1, 20
        %v237 = vld [vmem:[%s236] sm:$0xf]
        %s238 = scalar_lea.vmem %s1, 24
        %v239 = vld [vmem:[%s238] sm:$0xf]
        %s240 = scalar_lea.vmem %s1, 28
        %v241 = vld [vmem:[%s240] sm:$0xf]
        %s242 = scalar_lea.vmem %s1, 32
        %v243 = vld [vmem:[%s242] sm:$0xf]
        %v244 = vld [vmem:[%s2] sm:$0xf]
        %v245 = vld [vmem:[%s3] sm:$0xf]
        %v246 = vld [vmem:[%s195] sm:$0xff]
        %v247 = vld [vmem:[%s195 + $0x8] sm:$0xff]
        %v248 = vld [vmem:[%s195 + $0x10] sm:$0xf]
        %v249 = vld [vmem:[%s195 + $0x18] sm:$0xf]
        %v250 = vsel %vm223, 1, 0
        %v251 = vsel %vm224, 1, 0
        %vm252 = vcmp.eq.s32.totalorder %v250, 1
        %vm253 = vcmp.eq.s32.totalorder %v251, 1
        %v254 = vsel %vm252, %v246, 0.0
        %v255 = vsel %vm253, %v247, 0.0
        %v256 = vsel %vm252, %v248, 0.0
        %v257 = vsel %vm253, %v249, 0.0
        %v258 = vsel %vm225, 1, 0
        %v259 = vsel %vm226, 1, 0
        %vm260 = vcmp.eq.s32.totalorder %v258, 1
        %vm261 = vcmp.eq.s32.totalorder %v259, 1
        %v262 = vsel %vm260, %v246, 0.0
        %v263 = vsel %vm261, %v247, 0.0
        %v264 = vsel %vm260, %v248, 0.0
        %v265 = vsel %vm261, %v249, 0.0
        %270 = vrot.lane.b32.xlu0 %v254, 17
        %v271 = vpop.permute.xlu0 %270
        %272 = vrot.lane.b32.xlu0 %v255, 17
        %v273 = vpop.permute.xlu0 %272
        %274 = vrot.lane.b32.xlu0 %v256, 17
        %v275 = vpop.permute.xlu0 %274
        %276 = vrot.lane.b32.xlu0 %v257, 17
        %v277 = vpop.permute.xlu0 %276
        %vm278 = vcmask 138240
        %v279 = vsel %vm278, %v271, %v273
        %v280 = vsel %vm278, %v275, %v277
        %v284 = vsel %vm278, 0.0, %v271
        %v285 = vsel %vm278, 0.0, %v275
        %290 = vrot.lane.b32.xlu0 %v246, 16
        %v291 = vpop.permute.xlu0 %290
        %292 = vrot.lane.b32.xlu0 %v247, 16
        %v293 = vpop.permute.xlu0 %292
        %294 = vrot.lane.b32.xlu0 %v248, 16
        %v295 = vpop.permute.xlu0 %294
        %296 = vrot.lane.b32.xlu0 %v249, 16
        %v297 = vpop.permute.xlu0 %296
        %vm298 = vcmask 130048
        %v299 = vsel %vm298, %v291, %v293
        %v300 = vsel %vm298, %v295, %v297
        %v304 = vsel %vm298, 0.0, %v291
        %v305 = vsel %vm298, 0.0, %v295
        %vm306 = vcmask 97280
        %v308 = vsel %vm306, %v229, 0
        %vm310 = vcmask 1043456
        %v312 = vsel %vm310, %v305, 0
        %v314 = vsel %vm310, %v300, 0
        %316 = vmatpush.msra.mxu0 0.0
        %317 = vmatpush.msra.mxu0 0.0
        %318 = vmatpush.msra.mxu0 0.0
        %319 = vmatpush.msra.mxu0 0.0
        %320 = vmatpush.msra.mxu0 0.0
        %321 = vmatpush.msra.mxu0 0.0
        %322 = vmatpush.msra.mxu0 0.0
        %323 = vmatpush.msra.mxu0 0.0
        %324 = vmatpush.msra.mxu0 0.0
        %325 = vmatpush.msra.mxu0 0.0
        %326 = vmatpush.msra.mxu0 0.0
        %327 = vmatpush.msra.mxu0 0.0
        %328 = vmatpush.msra.mxu0 0.0
        %329 = vmatpush.msra.mxu0 0.0
        %330 = vmatpush.msra.mxu0 %v312
        %331 = vmatpush.msra.mxu0 %v304
        %332 = vmatmul.f32.gmra.mxu0 %v308
        %v333 = vpop.f32.mrf.mxu0
        %v334 = vadd.f32 0.0, %v333
        %335 = vdwg.mxu0
        %336 = vmatpush.msra.mxu0 0.0
        %337 = vmatpush.msra.mxu0 0.0
        %338 = vmatpush.msra.mxu0 0.0
        %339 = vmatpush.msra.mxu0 0.0
        %340 = vmatpush.msra.mxu0 0.0
        %341 = vmatpush.msra.mxu0 0.0
        %342 = vmatpush.msra.mxu0 0.0
        %343 = vmatpush.msra.mxu0 0.0
        %344 = vmatpush.msra.mxu0 0.0
        %345 = vmatpush.msra.mxu0 0.0
        %346 = vmatpush.msra.mxu0 0.0
        %347 = vmatpush.msra.mxu0 0.0
        %348 = vmatpush.msra.mxu0 0.0
        %349 = vmatpush.msra.mxu0 0.0
        %350 = vmatpush.msra.mxu0 %v314
        %351 = vmatpush.msra.mxu0 %v299
        %352 = vmatmul.f32.gmra.mxu0 %v308
        %v353 = vpop.f32.mrf.mxu0
        %v354 = vadd.f32 0.0, %v353
        %355 = vdwg.mxu0
        %v357 = vsel %vm306, %v227, 0
        %v360 = vsel %vm310, %v285, 0
        %v362 = vsel %vm310, %v280, 0
        %364 = vmatpush.msra.mxu0 0.0
        %365 = vmatpush.msra.mxu0 0.0
        %366 = vmatpush.msra.mxu0 0.0
        %367 = vmatpush.msra.mxu0 0.0
        %368 = vmatpush.msra.mxu0 0.0
        %369 = vmatpush.msra.mxu0 0.0
        %370 = vmatpush.msra.mxu0 0.0
        %371 = vmatpush.msra.mxu0 0.0
        %372 = vmatpush.msra.mxu0 0.0
        %373 = vmatpush.msra.mxu0 0.0
        %374 = vmatpush.msra.mxu0 0.0
        %375 = vmatpush.msra.mxu0 0.0
        %376 = vmatpush.msra.mxu0 0.0
        %377 = vmatpush.msra.mxu0 0.0
        %378 = vmatpush.msra.mxu0 %v360
        %379 = vmatpush.msra.mxu0 %v284
        %380 = vmatmul.f32.gmra.mxu0 %v357
        %v381 = vpop.f32.mrf.mxu0
        %v382 = vadd.f32 %v334, %v381
        %383 = vdwg.mxu0
        %384 = vmatpush.msra.mxu0 0.0
        %385 = vmatpush.msra.mxu0 0.0
        %386 = vmatpush.msra.mxu0 0.0
        %387 = vmatpush.msra.mxu0 0.0
        %388 = vmatpush.msra.mxu0 0.0
        %389 = vmatpush.msra.mxu0 0.0
        %390 = vmatpush.msra.mxu0 0.0
        %391 = vmatpush.msra.mxu0 0.0
        %392 = vmatpush.msra.mxu0 0.0
        %393 = vmatpush.msra.mxu0 0.0
        %394 = vmatpush.msra.mxu0 0.0
        %395 = vmatpush.msra.mxu0 0.0
        %396 = vmatpush.msra.mxu0 0.0
        %397 = vmatpush.msra.mxu0 0.0
        %398 = vmatpush.msra.mxu0 %v362
        %399 = vmatpush.msra.mxu0 %v279
        %400 = vmatmul.f32.gmra.mxu0 %v357
        %v401 = vpop.f32.mrf.mxu0
        %v402 = vadd.f32 %v354, %v401
        %403 = vdwg.mxu0
        %408 = vrot.lane.b32.xlu0 %v262, 15
        %v409 = vpop.permute.xlu0 %408
        %410 = vrot.lane.b32.xlu0 %v263, 15
        %v411 = vpop.permute.xlu0 %410
        %412 = vrot.lane.b32.xlu0 %v264, 15
        %v413 = vpop.permute.xlu0 %412
        %414 = vrot.lane.b32.xlu0 %v265, 15
        %v415 = vpop.permute.xlu0 %414
        %vm416 = vcmask 121856
        %v417 = vsel %vm416, %v409, %v411
        %v418 = vsel %vm416, %v413, %v415
        %v422 = vsel %vm416, 0.0, %v409
        %v423 = vsel %vm416, 0.0, %v413
        %v425 = vsel %vm306, %v231, 0
        %v428 = vsel %vm310, %v423, 0
        %v430 = vsel %vm310, %v418, 0
        %432 = vmatpush.msra.mxu0 0.0
        %433 = vmatpush.msra.mxu0 0.0
        %434 = vmatpush.msra.mxu0 0.0
        %435 = vmatpush.msra.mxu0 0.0
        %436 = vmatpush.msra.mxu0 0.0
        %437 = vmatpush.msra.mxu0 0.0
        %438 = vmatpush.msra.mxu0 0.0
        %439 = vmatpush.msra.mxu0 0.0
        %440 = vmatpush.msra.mxu0 0.0
        %441 = vmatpush.msra.mxu0 0.0
        %442 = vmatpush.msra.mxu0 0.0
        %443 = vmatpush.msra.mxu0 0.0
        %444 = vmatpush.msra.mxu0 0.0
        %445 = vmatpush.msra.mxu0 0.0
        %446 = vmatpush.msra.mxu0 %v428
        %447 = vmatpush.msra.mxu0 %v422
        %448 = vmatmul.f32.gmra.mxu0 %v425
        %v449 = vpop.f32.mrf.mxu0
        %v450 = vadd.f32 0.0, %v449
        %451 = vdwg.mxu0
        %452 = vmatpush.msra.mxu0 0.0
        %453 = vmatpush.msra.mxu0 0.0
        %454 = vmatpush.msra.mxu0 0.0
        %455 = vmatpush.msra.mxu0 0.0
        %456 = vmatpush.msra.mxu0 0.0
        %457 = vmatpush.msra.mxu0 0.0
        %458 = vmatpush.msra.mxu0 0.0
        %459 = vmatpush.msra.mxu0 0.0
        %460 = vmatpush.msra.mxu0 0.0
        %461 = vmatpush.msra.mxu0 0.0
        %462 = vmatpush.msra.mxu0 0.0
        %463 = vmatpush.msra.mxu0 0.0
        %464 = vmatpush.msra.mxu0 0.0
        %465 = vmatpush.msra.mxu0 0.0
        %466 = vmatpush.msra.mxu0 %v430
        %467 = vmatpush.msra.mxu0 %v417
        %468 = vmatmul.f32.gmra.mxu0 %v425
        %v469 = vpop.f32.mrf.mxu0
        %v470 = vadd.f32 0.0, %v469
        %471 = vdwg.mxu0
        %v472 = vadd.f32 %v382, %v450
        %v473 = vadd.f32 %v402, %v470
        %474 = vrot.lane.b32.xlu0 %v254, 1
        %v475 = vpop.permute.xlu0 %474
        %476 = vrot.lane.b32.xlu0 %v255, 1
        %v477 = vpop.permute.xlu0 %476
        %478 = vrot.lane.b32.xlu0 %v256, 1
        %v479 = vpop.permute.xlu0 %478
        %480 = vrot.lane.b32.xlu0 %v257, 1
        %v481 = vpop.permute.xlu0 %480
        %vm482 = vcmask 7168
        %v483 = vsel %vm482, %v475, %v477
        %v484 = vsel %vm482, %v479, %v481
        %v488 = vsel %vm482, 0.0, %v475
        %v489 = vsel %vm482, 0.0, %v479
        %v491 = vsel %vm306, %v233, 0
        %v494 = vsel %vm310, %v489, 0
        %v496 = vsel %vm310, %v484, 0
        %498 = vmatpush.msra.mxu0 0.0
        %499 = vmatpush.msra.mxu0 0.0
        %500 = vmatpush.msra.mxu0 0.0
        %501 = vmatpush.msra.mxu0 0.0
        %502 = vmatpush.msra.mxu0 0.0
        %503 = vmatpush.msra.mxu0 0.0
        %504 = vmatpush.msra.mxu0 0.0
        %505 = vmatpush.msra.mxu0 0.0
        %506 = vmatpush.msra.mxu0 0.0
        %507 = vmatpush.msra.mxu0 0.0
        %508 = vmatpush.msra.mxu0 0.0
        %509 = vmatpush.msra.mxu0 0.0
        %510 = vmatpush.msra.mxu0 0.0
        %511 = vmatpush.msra.mxu0 0.0
        %512 = vmatpush.msra.mxu0 %v494
        %513 = vmatpush.msra.mxu0 %v488
        %514 = vmatmul.f32.gmra.mxu0 %v491
        %v515 = vpop.f32.mrf.mxu0
        %v516 = vadd.f32 0.0, %v515
        %517 = vdwg.mxu0
        %518 = vmatpush.msra.mxu0 0.0
        %519 = vmatpush.msra.mxu0 0.0
        %520 = vmatpush.msra.mxu0 0.0
        %521 = vmatpush.msra.mxu0 0.0
        %522 = vmatpush.msra.mxu0 0.0
        %523 = vmatpush.msra.mxu0 0.0
        %524 = vmatpush.msra.mxu0 0.0
        %525 = vmatpush.msra.mxu0 0.0
        %526 = vmatpush.msra.mxu0 0.0
        %527 = vmatpush.msra.mxu0 0.0
        %528 = vmatpush.msra.mxu0 0.0
        %529 = vmatpush.msra.mxu0 0.0
        %530 = vmatpush.msra.mxu0 0.0
        %531 = vmatpush.msra.mxu0 0.0
        %532 = vmatpush.msra.mxu0 %v496
        %533 = vmatpush.msra.mxu0 %v483
        %534 = vmatmul.f32.gmra.mxu0 %v491
        %v535 = vpop.f32.mrf.mxu0
        %v536 = vadd.f32 0.0, %v535
        %537 = vdwg.mxu0
        %v538 = vadd.f32 %v472, %v516
        %v539 = vadd.f32 %v473, %v536
        %v541 = vsel %vm306, %v235, 0
        %v543 = vsel %vm310, %v248, 0
        %v545 = vsel %vm310, %v249, 0
        %547 = vmatpush.msra.mxu0 0.0
        %548 = vmatpush.msra.mxu0 0.0
        %549 = vmatpush.msra.mxu0 0.0
        %550 = vmatpush.msra.mxu0 0.0
        %551 = vmatpush.msra.mxu0 0.0
        %552 = vmatpush.msra.mxu0 0.0
        %553 = vmatpush.msra.mxu0 0.0
        %554 = vmatpush.msra.mxu0 0.0
        %555 = vmatpush.msra.mxu0 0.0
        %556 = vmatpush.msra.mxu0 0.0
        %557 = vmatpush.msra.mxu0 0.0
        %558 = vmatpush.msra.mxu0 0.0
        %559 = vmatpush.msra.mxu0 0.0
        %560 = vmatpush.msra.mxu0 0.0
        %561 = vmatpush.msra.mxu0 %v543
        %562 = vmatpush.msra.mxu0 %v246
        %563 = vmatmul.f32.gmra.mxu0 %v541
        %v564 = vpop.f32.mrf.mxu0
        %v565 = vadd.f32 0.0, %v564
        %566 = vdwg.mxu0
        %567 = vmatpush.msra.mxu0 0.0
        %568 = vmatpush.msra.mxu0 0.0
        %569 = vmatpush.msra.mxu0 0.0
        %570 = vmatpush.msra.mxu0 0.0
        %571 = vmatpush.msra.mxu0 0.0
        %572 = vmatpush.msra.mxu0 0.0
        %573 = vmatpush.msra.mxu0 0.0
        %574 = vmatpush.msra.mxu0 0.0
        %575 = vmatpush.msra.mxu0 0.0
        %576 = vmatpush.msra.mxu0 0.0
        %577 = vmatpush.msra.mxu0 0.0
        %578 = vmatpush.msra.mxu0 0.0
        %579 = vmatpush.msra.mxu0 0.0
        %580 = vmatpush.msra.mxu0 0.0
        %581 = vmatpush.msra.mxu0 %v545
        %582 = vmatpush.msra.mxu0 %v247
        %583 = vmatmul.f32.gmra.mxu0 %v541
        %v584 = vpop.f32.mrf.mxu0
        %v585 = vadd.f32 0.0, %v584
        %586 = vdwg.mxu0
        %v587 = vadd.f32 %v538, %v565
        %v588 = vadd.f32 %v539, %v585
        %589 = vrot.lane.b32.xlu0 %v262, 127
        %v590 = vpop.permute.xlu0 %589
        %591 = vrot.lane.b32.xlu0 %v263, 127
        %v592 = vpop.permute.xlu0 %591
        %593 = vrot.lane.b32.xlu0 %v264, 127
        %v594 = vpop.permute.xlu0 %593
        %595 = vrot.lane.b32.xlu0 %v265, 127
        %v596 = vpop.permute.xlu0 %595
        %vm597 = vcmask 1039360
        %v598 = vsel %vm597, %v590, %v592
        %v599 = vsel %vm597, %v594, %v596
        %v603 = vsel %vm597, %v592, 0.0
        %v604 = vsel %vm597, %v596, 0.0
        %v606 = vsel %vm306, %v237, 0
        %v608 = vsel %vm310, %v599, 0
        %v611 = vsel %vm310, %v604, 0
        %613 = vmatpush.msra.mxu0 0.0
        %614 = vmatpush.msra.mxu0 0.0
        %615 = vmatpush.msra.mxu0 0.0
        %616 = vmatpush.msra.mxu0 0.0
        %617 = vmatpush.msra.mxu0 0.0
        %618 = vmatpush.msra.mxu0 0.0
        %619 = vmatpush.msra.mxu0 0.0
        %620 = vmatpush.msra.mxu0 0.0
        %621 = vmatpush.msra.mxu0 0.0
        %622 = vmatpush.msra.mxu0 0.0
        %623 = vmatpush.msra.mxu0 0.0
        %624 = vmatpush.msra.mxu0 0.0
        %625 = vmatpush.msra.mxu0 0.0
        %626 = vmatpush.msra.mxu0 0.0
        %627 = vmatpush.msra.mxu0 %v608
        %628 = vmatpush.msra.mxu0 %v598
        %629 = vmatmul.f32.gmra.mxu0 %v606
        %v630 = vpop.f32.mrf.mxu0
        %v631 = vadd.f32 0.0, %v630
        %632 = vdwg.mxu0
        %633 = vmatpush.msra.mxu0 0.0
        %634 = vmatpush.msra.mxu0 0.0
        %635 = vmatpush.msra.mxu0 0.0
        %636 = vmatpush.msra.mxu0 0.0
        %637 = vmatpush.msra.mxu0 0.0
        %638 = vmatpush.msra.mxu0 0.0
        %639 = vmatpush.msra.mxu0 0.0
        %640 = vmatpush.msra.mxu0 0.0
        %641 = vmatpush.msra.mxu0 0.0
        %642 = vmatpush.msra.mxu0 0.0
        %643 = vmatpush.msra.mxu0 0.0
        %644 = vmatpush.msra.mxu0 0.0
        %645 = vmatpush.msra.mxu0 0.0
        %646 = vmatpush.msra.mxu0 0.0
        %647 = vmatpush.msra.mxu0 %v611
        %648 = vmatpush.msra.mxu0 %v603
        %649 = vmatmul.f32.gmra.mxu0 %v606
        %v650 = vpop.f32.mrf.mxu0
        %v651 = vadd.f32 0.0, %v650
        %652 = vdwg.mxu0
        %v653 = vadd.f32 %v587, %v631
        %v654 = vadd.f32 %v588, %v651
        %655 = vrot.lane.b32.xlu0 %v254, 113
        %v656 = vpop.permute.xlu0 %655
        %657 = vrot.lane.b32.xlu0 %v255, 113
        %v658 = vpop.permute.xlu0 %657
        %659 = vrot.lane.b32.xlu0 %v256, 113
        %v660 = vpop.permute.xlu0 %659
        %661 = vrot.lane.b32.xlu0 %v257, 113
        %v662 = vpop.permute.xlu0 %661
        %vm663 = vcmask 924672
        %v664 = vsel %vm663, %v656, %v658
        %v665 = vsel %vm663, %v660, %v662
        %v669 = vsel %vm663, %v658, 0.0
        %v670 = vsel %vm663, %v662, 0.0
        %v672 = vsel %vm306, %v239, 0
        %v674 = vsel %vm310, %v665, 0
        %v677 = vsel %vm310, %v670, 0
        %679 = vmatpush.msra.mxu0 0.0
        %680 = vmatpush.msra.mxu0 0.0
        %681 = vmatpush.msra.mxu0 0.0
        %682 = vmatpush.msra.mxu0 0.0
        %683 = vmatpush.msra.mxu0 0.0
        %684 = vmatpush.msra.mxu0 0.0
        %685 = vmatpush.msra.mxu0 0.0
        %686 = vmatpush.msra.mxu0 0.0
        %687 = vmatpush.msra.mxu0 0.0
        %688 = vmatpush.msra.mxu0 0.0
        %689 = vmatpush.msra.mxu0 0.0
        %690 = vmatpush.msra.mxu0 0.0
        %691 = vmatpush.msra.mxu0 0.0
        %692 = vmatpush.msra.mxu0 0.0
        %693 = vmatpush.msra.mxu0 %v674
        %694 = vmatpush.msra.mxu0 %v664
        %695 = vmatmul.f32.gmra.mxu0 %v672
        %v696 = vpop.f32.mrf.mxu0
        %v697 = vadd.f32 0.0, %v696
        %698 = vdwg.mxu0
        %699 = vmatpush.msra.mxu0 0.0
        %700 = vmatpush.msra.mxu0 0.0
        %701 = vmatpush.msra.mxu0 0.0
        %702 = vmatpush.msra.mxu0 0.0
        %703 = vmatpush.msra.mxu0 0.0
        %704 = vmatpush.msra.mxu0 0.0
        %705 = vmatpush.msra.mxu0 0.0
        %706 = vmatpush.msra.mxu0 0.0
        %707 = vmatpush.msra.mxu0 0.0
        %708 = vmatpush.msra.mxu0 0.0
        %709 = vmatpush.msra.mxu0 0.0
        %710 = vmatpush.msra.mxu0 0.0
        %711 = vmatpush.msra.mxu0 0.0
        %712 = vmatpush.msra.mxu0 0.0
        %713 = vmatpush.msra.mxu0 %v677
        %714 = vmatpush.msra.mxu0 %v669
        %715 = vmatmul.f32.gmra.mxu0 %v672
        %v716 = vpop.f32.mrf.mxu0
        %v717 = vadd.f32 0.0, %v716
        %718 = vdwg.mxu0
        %v719 = vadd.f32 %v653, %v697
        %v720 = vadd.f32 %v654, %v717
        %721 = vrot.lane.b32.xlu0 %v246, 112
        %v722 = vpop.permute.xlu0 %721
        %723 = vrot.lane.b32.xlu0 %v247, 112
        %v724 = vpop.permute.xlu0 %723
        %725 = vrot.lane.b32.xlu0 %v248, 112
        %v726 = vpop.permute.xlu0 %725
        %727 = vrot.lane.b32.xlu0 %v249, 112
        %v728 = vpop.permute.xlu0 %727
        %vm729 = vcmask 916480
        %v730 = vsel %vm729, %v722, %v724
        %v731 = vsel %vm729, %v726, %v728
        %v735 = vsel %vm729, %v724, 0.0
        %v736 = vsel %vm729, %v728, 0.0
        %v738 = vsel %vm306, %v241, 0
        %v740 = vsel %vm310, %v731, 0
        %v743 = vsel %vm310, %v736, 0
        %745 = vmatpush.msra.mxu0 0.0
        %746 = vmatpush.msra.mxu0 0.0
        %747 = vmatpush.msra.mxu0 0.0
        %748 = vmatpush.msra.mxu0 0.0
        %749 = vmatpush.msra.mxu0 0.0
        %750 = vmatpush.msra.mxu0 0.0
        %751 = vmatpush.msra.mxu0 0.0
        %752 = vmatpush.msra.mxu0 0.0
        %753 = vmatpush.msra.mxu0 0.0
        %754 = vmatpush.msra.mxu0 0.0
        %755 = vmatpush.msra.mxu0 0.0
        %756 = vmatpush.msra.mxu0 0.0
        %757 = vmatpush.msra.mxu0 0.0
        %758 = vmatpush.msra.mxu0 0.0
        %759 = vmatpush.msra.mxu0 %v740
        %760 = vmatpush.msra.mxu0 %v730
        %761 = vmatmul.f32.gmra.mxu0 %v738
        %v762 = vpop.f32.mrf.mxu0
        %v763 = vadd.f32 0.0, %v762
        %764 = vdwg.mxu0
        %765 = vmatpush.msra.mxu0 0.0
        %766 = vmatpush.msra.mxu0 0.0
        %767 = vmatpush.msra.mxu0 0.0
        %768 = vmatpush.msra.mxu0 0.0
        %769 = vmatpush.msra.mxu0 0.0
        %770 = vmatpush.msra.mxu0 0.0
        %771 = vmatpush.msra.mxu0 0.0
        %772 = vmatpush.msra.mxu0 0.0
        %773 = vmatpush.msra.mxu0 0.0
        %774 = vmatpush.msra.mxu0 0.0
        %775 = vmatpush.msra.mxu0 0.0
        %776 = vmatpush.msra.mxu0 0.0
        %777 = vmatpush.msra.mxu0 0.0
        %778 = vmatpush.msra.mxu0 0.0
        %779 = vmatpush.msra.mxu0 %v743
        %780 = vmatpush.msra.mxu0 %v735
        %781 = vmatmul.f32.gmra.mxu0 %v738
        %v782 = vpop.f32.mrf.mxu0
        %v783 = vadd.f32 0.0, %v782
        %784 = vdwg.mxu0
        %v785 = vadd.f32 %v719, %v763
        %v786 = vadd.f32 %v720, %v783
        %787 = vrot.lane.b32.xlu0 %v262, 111
        %v788 = vpop.permute.xlu0 %787
        %789 = vrot.lane.b32.xlu0 %v263, 111
        %v790 = vpop.permute.xlu0 %789
        %791 = vrot.lane.b32.xlu0 %v264, 111
        %v792 = vpop.permute.xlu0 %791
        %793 = vrot.lane.b32.xlu0 %v265, 111
        %v794 = vpop.permute.xlu0 %793
        %vm795 = vcmask 908288
        %v796 = vsel %vm795, %v788, %v790
        %v797 = vsel %vm795, %v792, %v794
        %v801 = vsel %vm795, %v790, 0.0
        %v802 = vsel %vm795, %v794, 0.0
        %v804 = vsel %vm306, %v243, 0
        %v806 = vsel %vm310, %v797, 0
        %v809 = vsel %vm310, %v802, 0
        %811 = vmatpush.msra.mxu0 0.0
        %812 = vmatpush.msra.mxu0 0.0
        %813 = vmatpush.msra.mxu0 0.0
        %814 = vmatpush.msra.mxu0 0.0
        %815 = vmatpush.msra.mxu0 0.0
        %816 = vmatpush.msra.mxu0 0.0
        %817 = vmatpush.msra.mxu0 0.0
        %818 = vmatpush.msra.mxu0 0.0
        %819 = vmatpush.msra.mxu0 0.0
        %820 = vmatpush.msra.mxu0 0.0
        %821 = vmatpush.msra.mxu0 0.0
        %822 = vmatpush.msra.mxu0 0.0
        %823 = vmatpush.msra.mxu0 0.0
        %824 = vmatpush.msra.mxu0 0.0
        %825 = vmatpush.msra.mxu0 %v806
        %826 = vmatpush.msra.mxu0 %v796
        %827 = vmatmul.f32.gmra.mxu0 %v804
        %v828 = vpop.f32.mrf.mxu0
        %v829 = vadd.f32 0.0, %v828
        %830 = vdwg.mxu0
        %831 = vmatpush.msra.mxu0 0.0
        %832 = vmatpush.msra.mxu0 0.0
        %833 = vmatpush.msra.mxu0 0.0
        %834 = vmatpush.msra.mxu0 0.0
        %835 = vmatpush.msra.mxu0 0.0
        %836 = vmatpush.msra.mxu0 0.0
        %837 = vmatpush.msra.mxu0 0.0
        %838 = vmatpush.msra.mxu0 0.0
        %839 = vmatpush.msra.mxu0 0.0
        %840 = vmatpush.msra.mxu0 0.0
        %841 = vmatpush.msra.mxu0 0.0
        %842 = vmatpush.msra.mxu0 0.0
        %843 = vmatpush.msra.mxu0 0.0
        %844 = vmatpush.msra.mxu0 0.0
        %845 = vmatpush.msra.mxu0 %v809
        %846 = vmatpush.msra.mxu0 %v801
        %847 = vmatmul.f32.gmra.mxu0 %v804
        %v848 = vpop.f32.mrf.mxu0
        %v849 = vadd.f32 0.0, %v848
        %850 = vdwg.mxu0
        %v851 = vadd.f32 %v785, %v829
        %v852 = vadd.f32 %v786, %v849
        %v853 = vsel %vm310, %v851, 0.0
        %v854 = vrot.slane %v853, 4
        %v855 = vadd.f32 %v853, %v854
        %v856 = vrot.slane %v855, 2
        %v857 = vadd.f32 %v855, %v856
        %v858 = vrot.slane %v857, 1
        %v859 = vadd.f32 %v857, %v858
        %v860 = vsel %vm310, %v852, 0.0
        %v861 = vrot.slane %v860, 4
        %v862 = vadd.f32 %v860, %v861
        %v863 = vrot.slane %v862, 2
        %v864 = vadd.f32 %v862, %v863
        %v865 = vrot.slane %v864, 1
        %v866 = vadd.f32 %v864, %v865
        %v867 = vrcp.pop 4.0
        %v868 = vmul.f32 4.0, %v867
        %v869 = vsub.f32 1.0, %v868
        %v870 = vmul.f32 %v867, %v869
        %v871 = vadd.f32 %v867, %v870
        %vm872 = vweird.f32 %v867
        %v873 = vsel %vm872, %v867, %v871
        %v874 = vmul.f32 %v859, %v873
        %v875 = vmul.f32 %v866, %v873
        %v876 = vsub.f32 %v851, %v874
        %v877 = vsub.f32 %v852, %v875
        %v878 = vmul.f32 %v876, %v876
        %v879 = vmul.f32 %v877, %v877
        %v880 = vsel %vm310, %v878, 0.0
        %v881 = vrot.slane %v880, 4
        %v882 = vadd.f32 %v880, %v881
        %v883 = vrot.slane %v882, 2
        %v884 = vadd.f32 %v882, %v883
        %v885 = vrot.slane %v884, 1
        %v886 = vadd.f32 %v884, %v885
        %v887 = vsel %vm310, %v879, 0.0
        %v888 = vrot.slane %v887, 4
        %v889 = vadd.f32 %v887, %v888
        %v890 = vrot.slane %v889, 2
        %v891 = vadd.f32 %v889, %v890
        %v892 = vrot.slane %v891, 1
        %v893 = vadd.f32 %v891, %v892
        %v894 = vmul.f32 %v886, %v873
        %v895 = vmul.f32 %v893, %v873
        %v896 = vadd.f32 %v894, 1e-05
        %v897 = vadd.f32 %v895, 1e-05
        %v898 = vrsqrt.pop %v896
        %v899 = vmul.f32 %v898, %v896
        %v900 = vmul.f32 %v899, %v898
        %v901 = vmul.f32 0.5, %v900
        %v902 = vsub.f32 1.5, %v901
        %v903 = vmul.f32 %v898, %v902
        %vm904 = vweird.f32 %v896
        %vm905 = vweird.f32 %v898
        %vm906 = vmor %vm904, %vm905
        %v907 = vsel %vm906, %v898, %v903
        %v908 = vrsqrt.pop %v897
        %v909 = vmul.f32 %v908, %v897
        %v910 = vmul.f32 %v909, %v908
        %v911 = vmul.f32 0.5, %v910
        %v912 = vsub.f32 1.5, %v911
        %v913 = vmul.f32 %v908, %v912
        %vm914 = vweird.f32 %v897
        %vm915 = vweird.f32 %v908
        %vm916 = vmor %vm914, %vm915
        %v917 = vsel %vm916, %v908, %v913
        %v918 = vmul.f32 %v876, %v907
        %v919 = vmul.f32 %v877, %v917
        %921 = vset.pattern.permute.xlu0 0
        %922 = vperm.xlu0 %921, %v244
        %v923 = vpop.permute.xlu0 %922
        %v925 = vmul.f32 %v918, %v923
        %v926 = vmul.f32 %v919, %v923
        %928 = vset.pattern.permute.xlu0 0
        %929 = vperm.xlu0 %928, %v245
        %v930 = vpop.permute.xlu0 %929
        %v932 = vadd.f32 %v925, %v930
        %v933 = vadd.f32 %v926, %v930
        %v934 = vmul.f32 %v932, 0.5
        %v935 = vmul.f32 %v933, 0.5
        %v936 = vmul.f32 %v932, 0.70710677
        %v937 = vmul.f32 %v933, 0.70710677
        %v938 = vmul.f32 %v936, %v936
        %v939 = vmin.f32 16.0, %v938
        %v940 = vmul.f32 %v939, 2.1237322e-06
        %v941 = vadd.f32 %v940, 0.00028619796
        %v942 = vmul.f32 %v939, %v941
        %v943 = vadd.f32 %v942, 0.0036580483
        %v944 = vmul.f32 %v939, %v943
        %v945 = vadd.f32 %v944, 0.05243302
        %v946 = vmul.f32 %v939, %v945
        %v947 = vadd.f32 %v946, 0.18741608
        %v948 = vmul.f32 %v939, %v947
        %v949 = vadd.f32 %v948, 1.1283791
        %v950 = vmul.f32 %v936, %v949
        %v951 = vmul.f32 %v939, 3.8918573e-05
        %v952 = vadd.f32 %v951, 0.001143296
        %v953 = vmul.f32 %v939, %v952
        %v954 = vadd.f32 %v953, 0.014752088
        %v955 = vmul.f32 %v939, %v954
        %v956 = vadd.f32 %v955, 0.112945676
        %v957 = vmul.f32 %v939, %v956
        %v958 = vadd.f32 %v957, 0.4994258
        %v959 = vmul.f32 %v939, %v958
        %v960 = vadd.f32 %v959, 1.0
        %v961 = vrcp.pop %v960
        %v962 = vmul.f32 %v960, %v961
        %v963 = vsub.f32 1.0, %v962
        %v964 = vmul.f32 %v961, %v963
        %v965 = vadd.f32 %v961, %v964
        %vm966 = vweird.f32 %v960
        %vm967 = vweird.f32 %v961
        %vm968 = vmor %vm966, %vm967
        %v969 = vsel %vm968, %v961, %v965
        %v970 = vand.u32 2147483647, %v960
        %vm971 = vcmp.eq.f32.partialorder %v970, 8.507059e+37
        %v972 = vand.u32 %v960, 2147483648
        %v973 = vor.u32 1.1754944e-38, %v972
        %v974 = vsel %vm971, %v973, %v969
        %v975 = vmul.f32 %v950, %v974
        %v976 = vmin.f32 %v975, 1.0
        %v977 = vmax.f32 %v976, -1.0
        %v978 = vmul.f32 %v937, %v937
        %v979 = vmin.f32 16.0, %v978
        %v980 = vmul.f32 %v979, 2.1237322e-06
        %v981 = vadd.f32 %v980, 0.00028619796
        %v982 = vmul.f32 %v979, %v981
        %v983 = vadd.f32 %v982, 0.0036580483
        %v984 = vmul.f32 %v979, %v983
        %v985 = vadd.f32 %v984, 0.05243302
        %v986 = vmul.f32 %v979, %v985
        %v987 = vadd.f32 %v986, 0.18741608
        %v988 = vmul.f32 %v979, %v987
        %v989 = vadd.f32 %v988, 1.1283791
        %v990 = vmul.f32 %v937, %v989
        %v991 = vmul.f32 %v979, 3.8918573e-05
        %v992 = vadd.f32 %v991, 0.001143296
        %v993 = vmul.f32 %v979, %v992
        %v994 = vadd.f32 %v993, 0.014752088
        %v995 = vmul.f32 %v979, %v994
        %v996 = vadd.f32 %v995, 0.112945676
        %v997 = vmul.f32 %v979, %v996
        %v998 = vadd.f32 %v997, 0.4994258
        %v999 = vmul.f32 %v979, %v998
        %v1000 = vadd.f32 %v999, 1.0
        %v1001 = vrcp.pop %v1000
        %v1002 = vmul.f32 %v1000, %v1001
        %v1003 = vsub.f32 1.0, %v1002
        %v1004 = vmul.f32 %v1001, %v1003
        %v1005 = vadd.f32 %v1001, %v1004
        %vm1006 = vweird.f32 %v1000
        %vm1007 = vweird.f32 %v1001
        %vm1008 = vmor %vm1006, %vm1007
        %v1009 = vsel %vm1008, %v1001, %v1005
        %v1010 = vand.u32 2147483647, %v1000
        %vm1011 = vcmp.eq.f32.partialorder %v1010, 8.507059e+37
        %v1012 = vand.u32 %v1000, 2147483648
        %v1013 = vor.u32 1.1754944e-38, %v1012
        %v1014 = vsel %vm1011, %v1013, %v1009
        %v1015 = vmul.f32 %v990, %v1014
        %v1016 = vmin.f32 %v1015, 1.0
        %v1017 = vmax.f32 %v1016, -1.0
        %v1018 = vadd.f32 %v977, 1.0
        %v1019 = vadd.f32 %v1017, 1.0
        %v1020 = vmul.f32 %v934, %v1018
        %v1021 = vmul.f32 %v935, %v1019
        %v1024 = vrot.slane %v1021, 4
        %v1025 = vsel %vm310, %v1020, %v1024
        %1027 = vst [vmem:[%s190] sm:$0xff] %v1025
        %s1028 = sand.u32 %s115, 1
        %s1029 = scalar_lea.sflag [#allocation3], %s1028
        %s1030 = sand.u32 %s115, 1
        %s1031 = smul.addr %s1030, 8
        %s1032 = scalar_lea.vmem [#allocation2], %s1031
        // Predicated region
        $region37: #{tpu_custom_call.1} parent=35 // pred_check
          %p1033 = pneg %p125
        $region38: #{tpu_custom_call.1} parent=35 // pred_check_branch
          %1035 = sbr.rel (%p1033) target = $region40
        $region39: #{tpu_custom_call.1} parent=35 // pred_region
          %1037 = vsyncadd %s1029, 0
          %s1038 = smul.addr %s18, 2
          %s1039 = smul.addr %s1038, 4
          %s1040 = scalar_lea.hbm %s4, %s1039
          %s1042 = sshll.u32 %s1032, 4
          %s1043 = int_to_ptr.vmem [resolvable:$true] %s1042
          %s1044 = sshll.u32 %s1040, 4
          %s1045 = int_to_ptr.hbm [resolvable:$true] %s1044
          %1047 = dma.vmem_to_hbm [thread:$0]  %s1043, 128, %s1045, %s1029
        $region40: #{tpu_custom_call.1} parent=35 // pred_fallthru
          _
      $region36: #{tpu_custom_call.1} parent=5 // pred_fallthru
        _
      %p1048 = scmp.le.s32.totalorder 2, %s13
      // Predicated region
      $region41: #{tpu_custom_call.1} parent=5 // pred_check
        %p1049 = pneg %p1048
      $region42: #{tpu_custom_call.1} parent=5 // pred_check_branch
        %1051 = sbr.rel (%p1049) target = $region44
      $region43: #{tpu_custom_call.1} parent=5 // pred_region
        %s1052 = ssub.s32 %s13, 2
        // Predicated region
        $region45: #{tpu_custom_call.1} parent=43 // pred_check
          %p1053 = pneg %p131
        $region46: #{tpu_custom_call.1} parent=43 // pred_check_branch
          %1055 = sbr.rel (%p1053) target = $region48
        $region47: #{tpu_custom_call.1} parent=43 // pred_region
          %s1056 = sand.u32 %s116, 1
          %s1057 = scalar_lea.sflag [#allocation3], %s1056
          %s1058 = sand.u32 %s116, 1
          %s1059 = smul.addr %s1058, 8
          %s1060 = scalar_lea.vmem [#allocation2], %s1059
          %1062 = dma.done %s1057, 128
        $region48: #{tpu_custom_call.1} parent=43 // pred_fallthru
          _
      $region44: #{tpu_custom_call.1} parent=5 // pred_fallthru
        _
    $region6: #{tpu_custom_call.1} parent=1 // loop_footer
      %s17 = sadd.s32 1, %s13
    $region7: #{tpu_custom_call.1} parent=1 // loop_footer_branch
      %12 = sbr.rel target = $region3
    $region8: #{tpu_custom_call.1} parent=1 // loop_exit
      _
    %1063 = vsyncpa [#allocation3], 1
    %s1064 = scalar_lea.sflag [#allocation3], 1
    %1065 = vsyncpa %s1064, 1

</llo_original>
